<compile_context>
chip_gen: v7x
topology: tpu7x:2x2x1
jax: 0.10.0
libtpu: 0.0.40
codegen_flags: <defaults>
</compile_context>

<pallas_src>
import functools

import jax
import jax.numpy as jnp
import numpy as np
from jax.experimental import pallas as pl
from jax.experimental.pallas import tpu as pltpu

C = 256          # feature / MCB output dim (fixed by the module's 1x1 convs)
HID = 32         # mcb_conv1 output channels
CLASS_NUM = 10   # synthetic class count for the textual one-hot input


# --------------------------------------------------------------------------
# Pallas kernel: one (batch, spatial-tile) grid step, channels-first, all f32.
# --------------------------------------------------------------------------
def _frontbone_level_kernel(p_ref, a_ref, w2_ref, amap_ref, afeat_ref, *, inv_hw):
    """
    p_ref    : (1, C, tq)   f32  feature pixels (channels x pixels)
    a_ref    : (1, HID, C)  f32  w1 folded into the per-batch MCB matrix
    w2_ref   : (1, HID, 1)  f32  1x1 conv 32->1 weight
    amap_ref : (1, 1, tq)   f32  attention-map tile (lane-dense store)
    afeat_ref: (1, C, 1)    f32  attention-pooled feature (resident accumulator)
    """
    t = pl.program_id(1)

    @pl.when(t == 0)
    def _init():
        afeat_ref[...] = jnp.zeros_like(afeat_ref)

    p = p_ref[0]                                                     # (C, tq)

    # Attention head; MCB (count-sketch + circular conv + *output_dim) and
    # conv1 are pre-folded into a_ref:  h = relu(A[b] @ p).
    h = jnp.maximum(
        jnp.dot(a_ref[0], p, preferred_element_type=jnp.float32), 0.0)   # (HID, tq)
    logit = jnp.sum(h * w2_ref[0], axis=0, keepdims=True)            # (1, tq)
    att = pl.reciprocal(1.0 + jnp.exp(-logit), approx=True)          # sigmoid

    amap_ref[0] = att                                                # lane-dense

    # Attention-weighted global average pool: accumulate across spatial tiles,
    # normalize once at the end.
    part = jnp.sum(att * p, axis=1, keepdims=True)                   # (C, 1)
    afeat_ref[0] = afeat_ref[0] + part

    @pl.when(t == pl.num_programs(1) - 1)
    def _finalize():
        afeat_ref[...] = afeat_ref[...] * inv_hw


def _choose_tq(hw):
    # hw <= 4096: a single full-extent tile (always layout-legal).  Larger maps
    # get the biggest 128-multiple tile <= 4096 that divides hw; 4096 f32 keeps
    # the p double-buffer at 8 MiB — fine even for v7x's 64 MiB VMEM.
    if hw <= 4096:
        return hw
    for t in (4096, 2048, 1024, 512, 256, 128):
        if hw % t == 0:
            return t
    return hw   # irregular large map: fall back to one full tile


def frontbone_level(p_nchw, a, w2):
    """One pyramid level.

    p_nchw: (B, C, H, W) f32, a: (B, HID, C) f32, w2: (B, HID, 1) f32.
    Returns att_map (B,1,H,W) and att_feat (B,C).
    """
    B, Cc, H, W = p_nchw.shape
    HW = H * W
    tq = _choose_tq(HW)
    nt = HW // tq if HW % tq == 0 else 1

    # NCHW -> (B, C, HW) is a free reshape; no cast, no extra HBM pass.
    p = p_nchw.reshape(B, Cc, HW)

    flops = int(B * HW * (2 * HID * Cc + 2 * Cc + 3 * HID))
    bytes_accessed = int(4 * (B * Cc * HW + B * HID * Cc + B * HW
                              + B * Cc + B * HID))
    cost = pl.CostEstimate(flops=flops, transcendentals=int(B * HW),
                           bytes_accessed=bytes_accessed)

    kernel = functools.partial(_frontbone_level_kernel, inv_hw=1.0 / HW)
    amap, afeat = pl.pallas_call(
        kernel,
        out_shape=(jax.ShapeDtypeStruct((B, 1, HW), jnp.float32),
                   jax.ShapeDtypeStruct((B, Cc, 1), jnp.float32)),
        grid_spec=pltpu.PrefetchScalarGridSpec(
            num_scalar_prefetch=0,
            grid=(B, nt),
            in_specs=[
                pl.BlockSpec((1, Cc, tq), lambda b, t: (b, 0, t)),    # pixels
                pl.BlockSpec((1, HID, Cc), lambda b, t: (b, 0, 0)),   # fused A
                pl.BlockSpec((1, HID, 1), lambda b, t: (b, 0, 0)),    # conv2 w
            ],
            out_specs=[
                pl.BlockSpec((1, 1, tq), lambda b, t: (b, 0, t)),     # att map
                pl.BlockSpec((1, Cc, 1), lambda b, t: (b, 0, 0)),     # att feat
            ],
        ),
        compiler_params=pltpu.CompilerParams(
            # Spatial axis carries the afeat accumulator -> "arbitrary";
            # batch is independent -> "parallel" (megacore split on v7x).
            # TODO(synk): for B < 2 on v7x, split the spatial axis across the
            # two TensorCores with per-half partial afeat outputs instead.
            dimension_semantics=("parallel", "arbitrary"),
            vmem_limit_bytes=32 * 1024 * 1024),
        cost_estimate=cost,
    )(p, a, w2)

    att_map = amap.reshape(B, 1, H, W)
    att_feat = afeat.reshape(B, Cc)
    return att_map, att_feat


# --------------------------------------------------------------------------
# Glue: parameters, count-sketch matrices, fused head matrix, forward.
# --------------------------------------------------------------------------
def make_count_sketch(key, in_dim, out_dim):
    kh, ks = jax.random.split(key)
    h = jax.random.randint(kh, (in_dim,), 0, out_dim)
    s = jnp.where(jax.random.bernoulli(ks, 0.5, (in_dim,)), 1.0, -1.0)
    return s[:, None] * jax.nn.one_hot(h, out_dim, dtype=jnp.float32)


def circulant_from_vec(u):
    """u: (B, C) -> M: (B, C, C) with M[b, m, k] = u[b, (k - m) % C]."""
    idx = (jnp.arange(C)[None, :] - jnp.arange(C)[:, None]) % C
    return u[:, idx]


def init_params(key):
    keys = jax.random.split(key, 16)
    params = {
        "emb_w": jax.random.normal(keys[0], (C, CLASS_NUM), jnp.float32) * 0.1,
        "emb_b": jax.random.normal(keys[1], (C,), jnp.float32) * 0.01,
    }
    for i, lvl in enumerate(("p3", "p4", "p5")):
        k = keys[2 + 4 * i: 6 + 4 * i]
        params[f"s1_{lvl}"] = make_count_sketch(k[0], C, C)
        params[f"s2_{lvl}"] = make_count_sketch(k[1], C, C)
        # 1x1 conv weights stored as channels-first matmul matrices, no bias
        params[f"w1_{lvl}"] = jax.random.normal(k[2], (HID, C), jnp.float32) * 2e-3
        params[f"w2_{lvl}"] = jax.random.normal(k[3], (HID, 1), jnp.float32) * 2e-3
    return params


def fused_head_matrix(params, lvl, t):
    """A[b] = w1 @ (C * s2 @ circulant(s1 @ t[b]))  ->  (B, HID, C), f32."""
    u = t @ params[f"s1_{lvl}"]                                       # (B, C)
    circ = circulant_from_vec(u)                                      # (B, C, C)
    m = float(C) * jnp.einsum("ij,bjk->bik", params[f"s2_{lvl}"], circ,
                              precision=jax.lax.Precision.HIGHEST)    # (B, C, C)
    # A[b,o,i] = sum_k w1[o,k] * m[b,i,k]   (== w1 @ m[b]^T)
    return jnp.einsum("ok,bik->boi", params[f"w1_{lvl}"], m,
                      precision=jax.lax.Precision.HIGHEST)            # (B, HID, C)


def frontbone_forward(params, P3, P4, P5, one_hot):
    # textual_emb Linear (tiny (B, class_num) x (class_num, 256) matmul: glue)
    t = one_hot @ params["emb_w"].T + params["emb_b"]                 # (B, 256)
    B = t.shape[0]
    outs = []
    # NOTE: P4/P5 are run as separate calls on purpose — stacking them along
    # batch would copy both feature maps through HBM (costlier than dispatch).
    for lvl, P in (("p3", P3), ("p4", P4), ("p5", P5)):
        a = fused_head_matrix(params, lvl, t)
        w2 = jnp.broadcast_to(params[f"w2_{lvl}"][None], (B, HID, 1))
        att_map, att_feat = frontbone_level(P, a, w2)
        outs += [att_map, att_feat]
    return tuple(outs)


# --------------------------------------------------------------------------
# Plain-JAX f32 reference (same math, no Pallas) used as a sanity check.
# --------------------------------------------------------------------------
def reference_level(P, s2, circ, w1_t, w2):
    B, Cc, H, W = P.shape
    p = jnp.transpose(P, (0, 2, 3, 1)).reshape(B, H * W, Cc)
    v = jnp.einsum("bpc,cd->bpd", p, s2, precision=jax.lax.Precision.HIGHEST)
    mcb = jnp.einsum("bpc,bcd->bpd", v, circ,
                     precision=jax.lax.Precision.HIGHEST) * float(Cc)
    h = jnp.maximum(jnp.einsum("bpc,hc->bph", mcb, w1_t,
                               precision=jax.lax.Precision.HIGHEST), 0.0)
    att = jax.nn.sigmoid(jnp.einsum("bph,ho->bpo", h, w2,
                                    precision=jax.lax.Precision.HIGHEST))
    amap = att.reshape(B, H, W)[:, None]
    afeat = jnp.mean(att * p, axis=1)
    return amap, afeat


if __name__ == "__main__":
    key = jax.random.PRNGKey(0)
    kp, k3, k4, k5, kl = jax.random.split(key, 5)
    params = init_params(kp)

    B = 2
    # Small shapes (the real model uses 128/64/64 spatial); the kernel tiles
    # the spatial axis, so the real shapes just give more grid steps.
    P3 = jax.random.normal(k3, (B, C, 16, 16), jnp.float32)
    P4 = jax.random.normal(k4, (B, C, 8, 8), jnp.float32)
    P5 = jax.random.normal(k5, (B, C, 8, 8), jnp.float32)
    labels = jax.random.randint(kl, (B,), 0, CLASS_NUM)
    one_hot = jax.nn.one_hot(labels, CLASS_NUM, dtype=jnp.float32)

    outs = jax.block_until_ready(frontbone_forward(params, P3, P4, P5, one_hot))
    (am3, af3, am4, af4, am5, af5) = outs

    assert am3.shape == (B, 1, 16, 16) and af3.shape == (B, C)
    assert am4.shape == (B, 1, 8, 8) and af4.shape == (B, C)
    assert am5.shape == (B, 1, 8, 8) and af5.shape == (B, C)

    # sanity check vs plain-JAX f32 reference
    t = one_hot @ params["emb_w"].T + params["emb_b"]
    for lvl, P, am, af in (("p3", P3, am3, af3),
                           ("p4", P4, am4, af4),
                           ("p5", P5, am5, af5)):
        circ = circulant_from_vec(t @ params[f"s1_{lvl}"])
        ram, raf = reference_level(P, params[f"s2_{lvl}"], circ,
                                   params[f"w1_{lvl}"], params[f"w2_{lvl}"])
        np.testing.assert_allclose(np.asarray(am), np.asarray(ram),
                                   rtol=0.0, atol=2e-2)
        np.testing.assert_allclose(np.asarray(af), np.asarray(raf),
                                   rtol=0.0, atol=2e-2)

    print("KERNEL_OK")
</pallas_src>

<mosaic_0001>
module attributes {stable_mosaic.version = 11 : i64} {
  func.func @_frontbone_level_kernel(%arg0: i32, %arg1: i32, %arg2: memref<1x256x256xf32, #tpu.memory_space<vmem>>, %arg3: memref<1x32x256xf32, #tpu.memory_space<vmem>>, %arg4: memref<1x32x1xf32, #tpu.memory_space<vmem>>, %arg5: memref<1x1x256xf32, #tpu.memory_space<vmem>>, %arg6: memref<1x256x1xf32, #tpu.memory_space<vmem>>) attributes {dimension_semantics = [#tpu.dimension_semantics<parallel>, #tpu.dimension_semantics<arbitrary>], iteration_bounds = array<i64: 2, 1>, scalar_prefetch = 0 : i64, scratch_operands = 0 : i64, tpu.core_type = #tpu.core_type<tc>, window_params = [{transform_indices = @transform_0, window_bounds = array<i64: 1, 256, 256>}, {transform_indices = @transform_1, window_bounds = array<i64: 1, 32, 256>}, {transform_indices = @transform_2, window_bounds = array<i64: 1, 32, 1>}, {transform_indices = @transform_3, window_bounds = array<i64: 1, 1, 256>}, {transform_indices = @transform_4, window_bounds = array<i64: 1, 256, 1>}]} {
    %c0_i32 = arith.constant 0 : i32
    %0 = arith.cmpi eq, %arg1, %c0_i32 : i32
    %1 = arith.extui %0 : i1 to i32
    %c0_i32_0 = arith.constant 0 : i32
    %2 = arith.cmpi ne, %1, %c0_i32_0 : i32
    scf.if %2 {
      %cst_25 = arith.constant 0.000000e+00 : f32
      %38 = vector.broadcast %cst_25 : f32 to vector<1x256x1xf32>
      %c0_26 = arith.constant 0 : index
      %c0_27 = arith.constant 0 : index
      %c0_28 = arith.constant 0 : index
      %39 = vector.load %arg6[%c0_26, %c0_27, %c0_28] : memref<1x256x1xf32, #tpu.memory_space<vmem>>, vector<1x256x1xf32>
      tpu.vector_store %arg6[%c0_26, %c0_27, %c0_28], %38 {strides = array<i32>} : memref<1x256x1xf32, #tpu.memory_space<vmem>>, vector<1x256x1xf32>,
    } else {
    }
    %c0 = arith.constant 0 : index
    %c0_1 = arith.constant 0 : index
    %c0_2 = arith.constant 0 : index
    %3 = vector.load %arg2[%c0, %c0_1, %c0_2] : memref<1x256x256xf32, #tpu.memory_space<vmem>>, vector<1x256x256xf32>
    %4 = vector.shape_cast %3 : vector<1x256x256xf32> to vector<256x256xf32>
    %c0_3 = arith.constant 0 : index
    %c0_4 = arith.constant 0 : index
    %c0_5 = arith.constant 0 : index
    %5 = vector.load %arg3[%c0_3, %c0_4, %c0_5] : memref<1x32x256xf32, #tpu.memory_space<vmem>>, vector<1x32x256xf32>
    %6 = vector.shape_cast %5 : vector<1x32x256xf32> to vector<32x256xf32>
    %cst = arith.constant dense<0.000000e+00> : vector<32x256xf32>
    %7 = tpu.matmul %6, %4, %cst {dimension_numbers = #tpu.dot_dimension_numbers<[1], [0], [0], [1], [0, 0, 1, 1], [], []>} : vector<32x256xf32>, vector<256x256xf32>, vector<32x256xf32> -> vector<32x256xf32>
    %cst_6 = arith.constant 0.000000e+00 : f32
    %8 = vector.broadcast %cst_6 : f32 to vector<32x256xf32>
    %9 = arith.maximumf %7, %8 : vector<32x256xf32>
    %c0_7 = arith.constant 0 : index
    %c0_8 = arith.constant 0 : index
    %c0_9 = arith.constant 0 : index
    %10 = vector.load %arg4[%c0_7, %c0_8, %c0_9] : memref<1x32x1xf32, #tpu.memory_space<vmem>>, vector<1x32x1xf32>
    %11 = vector.shape_cast %10 : vector<1x32x1xf32> to vector<32x1xf32>
    %12 = vector.broadcast %11 : vector<32x1xf32> to vector<32x256xf32>
    %13 = arith.mulf %9, %12 : vector<32x256xf32>
    %cst_10 = arith.constant dense<0.000000e+00> : vector<256xf32>
    %14 = vector.multi_reduction <add>, %13, %cst_10 [0] : vector<32x256xf32> to vector<256xf32>
    %15 = vector.shape_cast %14 : vector<256xf32> to vector<1x256xf32>
    %cst_11 = arith.constant 0.000000e+00 : f32
    %16 = vector.broadcast %cst_11 : f32 to vector<1x256xf32>
    %17 = arith.subf %16, %15 : vector<1x256xf32>
    %18 = math.exp %17 : vector<1x256xf32>
    %cst_12 = arith.constant 1.000000e+00 : f32
    %19 = vector.broadcast %cst_12 : f32 to vector<1x256xf32>
    %20 = arith.addf %19, %18 : vector<1x256xf32>
    %21 = tpu.reciprocal %20 {approx = true} : vector<1x256xf32> -> vector<1x256xf32>
    %c0_13 = arith.constant 0 : index
    %c0_14 = arith.constant 0 : index
    %c0_15 = arith.constant 0 : index
    %22 = vector.load %arg5[%c0_13, %c0_14, %c0_15] : memref<1x1x256xf32, #tpu.memory_space<vmem>>, vector<1x1x256xf32>
    %23 = vector.shape_cast %22 : vector<1x1x256xf32> to vector<1x256xf32>
    %24 = vector.shape_cast %21 : vector<1x256xf32> to vector<1x1x256xf32>
    tpu.vector_store %arg5[%c0_13, %c0_14, %c0_15], %24 {strides = array<i32>} : memref<1x1x256xf32, #tpu.memory_space<vmem>>, vector<1x1x256xf32>,
    %25 = vector.broadcast %21 : vector<1x256xf32> to vector<256x256xf32>
    %26 = arith.mulf %25, %4 : vector<256x256xf32>
    %cst_16 = arith.constant dense<0.000000e+00> : vector<256xf32>
    %27 = vector.multi_reduction <add>, %26, %cst_16 [1] : vector<256x256xf32> to vector<256xf32>
    %28 = vector.shape_cast %27 : vector<256xf32> to vector<256x1xf32>
    %c0_17 = arith.constant 0 : index
    %c0_18 = arith.constant 0 : index
    %c0_19 = arith.constant 0 : index
    %29 = vector.load %arg6[%c0_17, %c0_18, %c0_19] : memref<1x256x1xf32, #tpu.memory_space<vmem>>, vector<1x256x1xf32>
    %30 = vector.shape_cast %29 : vector<1x256x1xf32> to vector<256x1xf32>
    %31 = arith.addf %30, %28 : vector<256x1xf32>
    %c0_20 = arith.constant 0 : index
    %c0_21 = arith.constant 0 : index
    %c0_22 = arith.constant 0 : index
    %32 = vector.load %arg6[%c0_20, %c0_21, %c0_22] : memref<1x256x1xf32, #tpu.memory_space<vmem>>, vector<1x256x1xf32>
    %33 = vector.shape_cast %32 : vector<1x256x1xf32> to vector<256x1xf32>
    %34 = vector.shape_cast %31 : vector<256x1xf32> to vector<1x256x1xf32>
    tpu.vector_store %arg6[%c0_20, %c0_21, %c0_22], %34 {strides = array<i32>} : memref<1x256x1xf32, #tpu.memory_space<vmem>>, vector<1x256x1xf32>,
    %c0_i32_23 = arith.constant 0 : i32
    %35 = arith.cmpi eq, %arg1, %c0_i32_23 : i32
    %36 = arith.extui %35 : i1 to i32
    %c0_i32_24 = arith.constant 0 : i32
    %37 = arith.cmpi ne, %36, %c0_i32_24 : i32
    scf.if %37 {
      %c0_25 = arith.constant 0 : index
      %c0_26 = arith.constant 0 : index
      %c0_27 = arith.constant 0 : index
      %38 = vector.load %arg6[%c0_25, %c0_26, %c0_27] : memref<1x256x1xf32, #tpu.memory_space<vmem>>, vector<1x256x1xf32>
      %cst_28 = arith.constant 3.906250e-03 : f32
      %39 = vector.broadcast %cst_28 : f32 to vector<1x256x1xf32>
      %40 = arith.mulf %38, %39 : vector<1x256x1xf32>
      %c0_29 = arith.constant 0 : index
      %c0_30 = arith.constant 0 : index
      %c0_31 = arith.constant 0 : index
      %41 = vector.load %arg6[%c0_29, %c0_30, %c0_31] : memref<1x256x1xf32, #tpu.memory_space<vmem>>, vector<1x256x1xf32>
      tpu.vector_store %arg6[%c0_29, %c0_30, %c0_31], %40 {strides = array<i32>} : memref<1x256x1xf32, #tpu.memory_space<vmem>>, vector<1x256x1xf32>,
    } else {
    }
    return
  }
  func.func @transform_0(%arg0: i32, %arg1: i32) -> (i32, i32, i32) {
    %c0_i32 = arith.constant 0 : i32
    %c0_i32_0 = arith.constant 0 : i32
    return %arg0, %c0_i32, %arg1 : i32, i32, i32
  }
  func.func @transform_1(%arg0: i32, %arg1: i32) -> (i32, i32, i32) {
    %c0_i32 = arith.constant 0 : i32
    %c0_i32_0 = arith.constant 0 : i32
    %c0_i32_1 = arith.constant 0 : i32
    return %arg0, %c0_i32, %c0_i32_0 : i32, i32, i32
  }
  func.func @transform_2(%arg0: i32, %arg1: i32) -> (i32, i32, i32) {
    %c0_i32 = arith.constant 0 : i32
    %c0_i32_0 = arith.constant 0 : i32
    %c0_i32_1 = arith.constant 0 : i32
    return %arg0, %c0_i32, %c0_i32_0 : i32, i32, i32
  }
  func.func @transform_3(%arg0: i32, %arg1: i32) -> (i32, i32, i32) {
    %c0_i32 = arith.constant 0 : i32
    %c0_i32_0 = arith.constant 0 : i32
    return %arg0, %c0_i32, %arg1 : i32, i32, i32
  }
  func.func @transform_4(%arg0: i32, %arg1: i32) -> (i32, i32, i32) {
    %c0_i32 = arith.constant 0 : i32
    %c0_i32_0 = arith.constant 0 : i32
    %c0_i32_1 = arith.constant 0 : i32
    return %arg0, %c0_i32, %c0_i32_0 : i32, i32, i32
  }
}

</mosaic_0001>

<llo_original>
// kernel: tpu_custom_call.1
$region0: #{tpu_custom_call.1}
  #allocation0 [shape = 'u32[]', space=smem, size = 0x4, offset = 0x4, fixed_abs, tag = 'smem constant byte address 0x4 - core index']
  #allocation1 [shape = 'u32[144,128]{1,0:T(1,128)}', space=vmem, size = 0x12000, scoped, tag = 'internal scratch']
  %s0 = inlined_call_operand.hbm [shape: f32[2,256,256], index: 0, kind: input, shape index: {}]
  %s1 = inlined_call_operand.hbm [shape: f32[2,32,256], index: 1, kind: input, shape index: {}]
  %s2 = inlined_call_operand.vmem [shape: f32[2,32,1], index: 2, kind: input, shape index: {}]
  %s3 = inlined_call_operand.hbm [shape: f32[2,1,256], index: 3, kind: output, shape index: {0}]
  %s4 = inlined_call_operand.vmem [shape: f32[2,256,1], index: 4, kind: output, shape index: {1}]
  %5 = xla_tuple %s3, %s4
  %s6 = sld [smem:[#allocation0]]
  $region69: #{tpu_custom_call.1} parent=0
    _
  %s8 = ssub.s32 1, %s6
  %s9 = scalar_select 0, %s8, %s6
  $region1: #{tpu_custom_call.1} parent=0
    #allocation2 [shape = 'u8[524288]{0}', space=vmem, size = 0x80000, scoped, tag = 'input window, operand 0']
    #allocation3 [shape = 's32[2]{0}', space=sflag, size = 0x8, scoped, tag = 'scoped memory for tpu_custom_call.1']
    #allocation4 [shape = 's32[2]{0}', space=sflag, size = 0x8, scoped, tag = 'scoped memory for tpu_custom_call.1']
    #allocation5 [shape = 'u8[65536]{0}', space=vmem, size = 0x10000, scoped, tag = 'input window, operand 1']
    #allocation6 [shape = 's32[2]{0}', space=sflag, size = 0x8, scoped, tag = 'scoped memory for tpu_custom_call.1']
    #allocation7 [shape = 'u8[2048]{0}', space=vmem, size = 0x800, scoped, tag = 'output window, operand 0']
    %10 = vsyncpa [#allocation3], 0
    %s11 = scalar_lea.sflag [#allocation3], 1
    %12 = vsyncpa %s11, 0
    %13 = vsyncpa [#allocation6], 0
    %s14 = scalar_lea.sflag [#allocation6], 1
    %15 = vsyncpa %s14, 0
    %16 = vsyncpa [#allocation4], 0
    %s17 = scalar_lea.sflag [#allocation4], 1
    %18 = vsyncpa %s17, 0
    loop: start=0, step=1, limit=4
    $region2: #{tpu_custom_call.1} parent=1 // loop_pre_header
      _
    $region3: #{tpu_custom_call.1} parent=1 // loop_header
      %s20 = sphi 0, %s24
      %p21 = scmp.ge.s32.totalorder %s20, 4
      %s27 = sphi 0, %s39
      %s28 = sphi 0, %s35
      %s29 = sphi 0, %s27
      %s30 = sphi 0, %s28
      %s31 = sphi 0, %s29
      %s32 = sphi 0, %s30
      %s44 = sphi 0, %s46
      %s47 = sphi 0, %s44
      %s48 = sphi 0, %s47
      %s64 = sphi 0, %s48
      %s70 = sphi 0, %s72
      %s73 = sphi 0, %s70
      %s74 = sphi 0, %s73
      %s90 = sphi 0, %s74
      %s96 = sphi 0, %s98
      %s99 = sphi 0, %s96
      %s100 = sphi 0, %s99
      %s116 = sphi 0, %s100
      %s124 = sphi 0, %s126
      %s127 = sphi 0, %s124
      %s128 = sphi 0, %s127
      %s144 = sphi 0, %s128
      %s150 = sphi 0, %s152
      %s153 = sphi 0, %s150
      %s154 = sphi 0, %s153
      %s170 = sphi 0, %s154
    $region4: #{tpu_custom_call.1} parent=1 // loop_header_branch
      %23 = sbr.rel (%p21) target = $region8
    $region5: #{tpu_custom_call.1} parent=1 // loop_body
      %s25 = ssub.s32 %s20, 1
      %s26 = ssub.s32 %s20, 2
      %s33 = sadd.s32 1, %s28
      %p34 = scmp.ge.s32.totalorder %s33, 1
      %s35 = scalar_select %p34, 0, %s33
      %s36 = sadd.s32 1, %s27
      %s37 = scalar_select %p34, %s36, %s27
      %p38 = scmp.ge.s32.totalorder %s37, 2
      %s39 = scalar_select %p38, 0, %s37
      %s40 = ssub.s32 %s27, %s39
      %s41 = ssub.s32 %s28, %s35
      %s42 = sor.u32 %s40, %s41
      %p43 = scmp.eq.s32.totalorder %s42, 0
      %s45 = sadd.s32 %s44, 1
      %s46 = scalar_select %p43, %s44, %s45
      %p49 = pneg %p43
      %p50 = scmp.eq.s32.totalorder %s20, 1
      %p51 = por %p49, %p50
      %p52 = scmp.ne.s32.totalorder %s44, %s47
      %p53 = scmp.eq.s32.totalorder %s20, 0
      %p54 = por %p52, %p53
      %p55 = scmp.ne.s32.totalorder %s44, %s47
      %p56 = scmp.eq.s32.totalorder %s25, 1
      %p57 = por %p55, %p56
      %p58 = scmp.ne.s32.totalorder %s47, %s48
      %p59 = scmp.eq.s32.totalorder %s25, 0
      %p60 = por %p58, %p59
      %p61 = scmp.ne.s32.totalorder %s47, %s48
      %p62 = scmp.eq.s32.totalorder %s26, 1
      %p63 = por %p61, %p62
      %p65 = scmp.ne.s32.totalorder %s48, %s64
      %p66 = scmp.eq.s32.totalorder %s26, 0
      %p67 = por %p65, %p66
      %s68 = ssub.s32 %s27, %s39
      %p69 = scmp.eq.s32.totalorder %s68, 0
      %s71 = sadd.s32 %s70, 1
      %s72 = scalar_select %p69, %s70, %s71
      %p75 = pneg %p69
      %p76 = scmp.eq.s32.totalorder %s20, 1
      %p77 = por %p75, %p76
      %p78 = scmp.ne.s32.totalorder %s70, %s73
      %p79 = scmp.eq.s32.totalorder %s20, 0
      %p80 = por %p78, %p79
      %p81 = scmp.ne.s32.totalorder %s70, %s73
      %p82 = scmp.eq.s32.totalorder %s25, 1
      %p83 = por %p81, %p82
      %p84 = scmp.ne.s32.totalorder %s73, %s74
      %p85 = scmp.eq.s32.totalorder %s25, 0
      %p86 = por %p84, %p85
      %p87 = scmp.ne.s32.totalorder %s73, %s74
      %p88 = scmp.eq.s32.totalorder %s26, 1
      %p89 = por %p87, %p88
      %p91 = scmp.ne.s32.totalorder %s74, %s90
      %p92 = scmp.eq.s32.totalorder %s26, 0
      %p93 = por %p91, %p92
      %s94 = ssub.s32 %s27, %s39
      %p95 = scmp.eq.s32.totalorder %s94, 0
      %s97 = sadd.s32 %s96, 1
      %s98 = scalar_select %p95, %s96, %s97
      %p101 = pneg %p95
      %p102 = scmp.eq.s32.totalorder %s20, 1
      %p103 = por %p101, %p102
      %p104 = scmp.ne.s32.totalorder %s96, %s99
      %p105 = scmp.eq.s32.totalorder %s20, 0
      %p106 = por %p104, %p105
      %p107 = scmp.ne.s32.totalorder %s96, %s99
      %p108 = scmp.eq.s32.totalorder %s25, 1
      %p109 = por %p107, %p108
      %p110 = scmp.ne.s32.totalorder %s99, %s100
      %p111 = scmp.eq.s32.totalorder %s25, 0
      %p112 = por %p110, %p111
      %p113 = scmp.ne.s32.totalorder %s99, %s100
      %p114 = scmp.eq.s32.totalorder %s26, 1
      %p115 = por %p113, %p114
      %p117 = scmp.ne.s32.totalorder %s100, %s116
      %p118 = scmp.eq.s32.totalorder %s26, 0
      %p119 = por %p117, %p118
      %s120 = ssub.s32 %s27, %s39
      %s121 = ssub.s32 %s28, %s35
      %s122 = sor.u32 %s120, %s121
      %p123 = scmp.eq.s32.totalorder %s122, 0
      %s125 = sadd.s32 %s124, 1
      %s126 = scalar_select %p123, %s124, %s125
      %p129 = pneg %p123
      %p130 = scmp.eq.s32.totalorder %s20, 1
      %p131 = por %p129, %p130
      %p132 = scmp.ne.s32.totalorder %s124, %s127
      %p133 = scmp.eq.s32.totalorder %s20, 0
      %p134 = por %p132, %p133
      %p135 = scmp.ne.s32.totalorder %s124, %s127
      %p136 = scmp.eq.s32.totalorder %s25, 1
      %p137 = por %p135, %p136
      %p138 = scmp.ne.s32.totalorder %s127, %s128
      %p139 = scmp.eq.s32.totalorder %s25, 0
      %p140 = por %p138, %p139
      %p141 = scmp.ne.s32.totalorder %s127, %s128
      %p142 = scmp.eq.s32.totalorder %s26, 1
      %p143 = por %p141, %p142
      %p145 = scmp.ne.s32.totalorder %s128, %s144
      %p146 = scmp.eq.s32.totalorder %s26, 0
      %p147 = por %p145, %p146
      %s148 = ssub.s32 %s27, %s39
      %p149 = scmp.eq.s32.totalorder %s148, 0
      %s151 = sadd.s32 %s150, 1
      %s152 = scalar_select %p149, %s150, %s151
      %p155 = pneg %p149
      %p156 = scmp.eq.s32.totalorder %s20, 1
      %p157 = por %p155, %p156
      %p158 = scmp.ne.s32.totalorder %s150, %s153
      %p159 = scmp.eq.s32.totalorder %s20, 0
      %p160 = por %p158, %p159
      %p161 = scmp.ne.s32.totalorder %s150, %s153
      %p162 = scmp.eq.s32.totalorder %s25, 1
      %p163 = por %p161, %p162
      %p164 = scmp.ne.s32.totalorder %s153, %s154
      %p165 = scmp.eq.s32.totalorder %s25, 0
      %p166 = por %p164, %p165
      %p167 = scmp.ne.s32.totalorder %s153, %s154
      %p168 = scmp.eq.s32.totalorder %s26, 1
      %p169 = por %p167, %p168
      %p171 = scmp.ne.s32.totalorder %s154, %s170
      %p172 = scmp.eq.s32.totalorder %s26, 0
      %p173 = por %p171, %p172
      %p174 = scmp.le.s32.totalorder 1, %s20
      %p175 = scmp.lt.s32.totalorder %s20, 3
      %p176 = pnand %p174, %p175
      %p177 = pneg %p176
      // Predicated region
      $region9: #{tpu_custom_call.1} parent=5 // pred_check
        _
      $region10: #{tpu_custom_call.1} parent=5 // pred_check_branch
        %179 = sbr.rel (%p176) target = $region12
      $region11: #{tpu_custom_call.1} parent=5 // pred_region
        %s180 = ssub.s32 %s20, 1
      $region12: #{tpu_custom_call.1} parent=5 // pred_fallthru
        _
      %p181 = scmp.lt.s32.totalorder %s20, 2
      // Predicated region
      $region13: #{tpu_custom_call.1} parent=5 // pred_check
        %p182 = pneg %p181
      $region14: #{tpu_custom_call.1} parent=5 // pred_check_branch
        %184 = sbr.rel (%p182) target = $region16
      $region15: #{tpu_custom_call.1} parent=5 // pred_region
        // Predicated region
        $region17: #{tpu_custom_call.1} parent=15 // pred_check
          %p185 = pneg %p54
        $region18: #{tpu_custom_call.1} parent=15 // pred_check_branch
          %187 = sbr.rel (%p185) target = $region20
        $region19: #{tpu_custom_call.1} parent=15 // pred_region
          %s188 = sand.u32 %s44, 1
          %s189 = scalar_lea.sflag [#allocation3], %s188
          %s190 = sand.u32 %s44, 1
          %s191 = smul.addr %s190, 512
          %s192 = scalar_lea.vmem [#allocation2], %s191
          %s193 = smul.u32 2, %s28
          %s195 = ssub.s32 8192, 8192
          %196 = vsyncadd %s189, %s195
          %s197 = smul.addr %s27, 64
          %s198 = sadd.s32 %s193, %s197
          %s199 = smul.addr %s198, 128
          %s200 = scalar_lea.hbm %s0, %s199
          %s201 = sshll.u32 %s192, 4
          %s202 = int_to_ptr.vmem [resolvable:$true] %s201
          %207 = dma.hbm_to_vmem [thread:$0]  %s200, 8192, %s202, %s189, 256, 256, 16
        $region20: #{tpu_custom_call.1} parent=15 // pred_fallthru
          _
        // Predicated region
        $region21: #{tpu_custom_call.1} parent=15 // pred_check
          %p208 = pneg %p80
        $region22: #{tpu_custom_call.1} parent=15 // pred_check_branch
          %210 = sbr.rel (%p208) target = $region24
        $region23: #{tpu_custom_call.1} parent=15 // pred_region
          %s211 = sand.u32 %s70, 1
          %s212 = scalar_lea.sflag [#allocation6], %s211
          %s213 = sand.u32 %s70, 1
          %s214 = smul.addr %s213, 64
          %s215 = scalar_lea.vmem [#allocation5], %s214
          %s217 = ssub.s32 1024, 1024
          %218 = vsyncadd %s212, %s217
          %s219 = smul.addr %s27, 8
          %s220 = smul.addr %s219, 128
          %s221 = scalar_lea.hbm %s1, %s220
          %s222 = sshll.u32 %s215, 4
          %s223 = int_to_ptr.vmem [resolvable:$true] %s222
          %228 = dma.hbm_to_vmem [thread:$0]  %s221, 1024, %s223, %s212, 256, 256, 16
        $region24: #{tpu_custom_call.1} parent=15 // pred_fallthru
          _
        // Predicated region
        $region25: #{tpu_custom_call.1} parent=15 // pred_check
          %p229 = pneg %p106
        $region26: #{tpu_custom_call.1} parent=15 // pred_check_branch
          %231 = sbr.rel (%p229) target = $region28
        $region27: #{tpu_custom_call.1} parent=15 // pred_region
          %p232 = scmp.lt.s32.totalorder %s27, 1
          %s233 = scalar_select %p232, %s27, 1
          %s234 = smul.addr %s233, 4
          %s235 = smul.addr %s234, 8
          %s236 = scalar_lea.vmem %s2, %s235
        $region28: #{tpu_custom_call.1} parent=15 // pred_fallthru
          _
      $region16: #{tpu_custom_call.1} parent=5 // pred_fallthru
        _
      %p237 = scmp.le.s32.totalorder 1, %s20
      %p238 = scmp.lt.s32.totalorder %s20, 3
      %p239 = pnand %p237, %p238
      %p240 = pneg %p239
      // Predicated region
      $region29: #{tpu_custom_call.1} parent=5 // pred_check
        _
      $region30: #{tpu_custom_call.1} parent=5 // pred_check_branch
        %242 = sbr.rel (%p239) target = $region32
      $region31: #{tpu_custom_call.1} parent=5 // pred_region
        %s243 = ssub.s32 %s20, 1
        %s244 = sand.u32 %s47, 1
        %s245 = scalar_lea.sflag [#allocation3], %s244
        %s246 = sand.u32 %s47, 1
        %s247 = smul.addr %s246, 512
        %s248 = scalar_lea.vmem [#allocation2], %s247
        // Predicated region
        $region33: #{tpu_custom_call.1} parent=31 // pred_check
          %p249 = pneg %p60
        $region34: #{tpu_custom_call.1} parent=31 // pred_check_branch
          %251 = sbr.rel (%p249) target = $region36
        $region35: #{tpu_custom_call.1} parent=31 // pred_region
          %252 = dma.done %s245, 8192
        $region36: #{tpu_custom_call.1} parent=31 // pred_fallthru
          _
        %s253 = sand.u32 %s73, 1
        %s254 = scalar_lea.sflag [#allocation6], %s253
        %s255 = sand.u32 %s73, 1
        %s256 = smul.addr %s255, 64
        %s257 = scalar_lea.vmem [#allocation5], %s256
        // Predicated region
        $region37: #{tpu_custom_call.1} parent=31 // pred_check
          %p258 = pneg %p86
        $region38: #{tpu_custom_call.1} parent=31 // pred_check_branch
          %260 = sbr.rel (%p258) target = $region40
        $region39: #{tpu_custom_call.1} parent=31 // pred_region
          %261 = dma.done %s254, 1024
        $region40: #{tpu_custom_call.1} parent=31 // pred_fallthru
          _
        %s262 = sand.u32 %s47, 1
        %s263 = scalar_lea.sflag [#allocation3], %s262
        %s264 = sand.u32 %s47, 1
        %s265 = smul.addr %s264, 512
        %s266 = scalar_lea.vmem [#allocation2], %s265
        %p267 = pneg %p60
        %p268 = pneg %p57
        %s269 = sand.u32 %s73, 1
        %s270 = scalar_lea.sflag [#allocation6], %s269
        %s271 = sand.u32 %s73, 1
        %s272 = smul.addr %s271, 64
        %s273 = scalar_lea.vmem [#allocation5], %s272
        %p274 = pneg %p86
        %p275 = pneg %p83
        %p276 = scmp.lt.s32.totalorder %s29, 1
        %s277 = scalar_select %p276, %s29, 1
        %s278 = smul.addr %s277, 4
        %s279 = smul.addr %s278, 8
        %s280 = scalar_lea.vmem %s2, %s279
        %p281 = pneg %p112
        %p282 = pneg %p109
        %p283 = pneg %p140
        %p284 = pneg %p137
        %s285 = sand.u32 %s127, 1
        %s286 = scalar_lea.sflag [#allocation4], %s285
        %s287 = sand.u32 %s127, 1
        %s288 = smul.addr %s287, 2
        %s289 = scalar_lea.vmem [#allocation7], %s288
        %p290 = pneg %p166
        %p291 = pneg %p163
        %p292 = scmp.lt.s32.totalorder %s29, 1
        %s293 = scalar_select %p292, %s29, 1
        %s294 = smul.addr %s293, 32
        %s295 = smul.addr %s294, 8
        %s296 = scalar_lea.vmem %s4, %s295
        %s297 = smul.u32 2, %s30
        %p298 = scmp.lt.s32.totalorder %s29, 1
        %s299 = scalar_select %p298, %s29, 1
        %s300 = smul.addr %s299, 4
        %s301 = smul.addr %s300, 8
        %s302 = scalar_lea.vmem %s2, %s301
        %s303 = smul.u32 2, %s30
        %p304 = scmp.lt.s32.totalorder %s29, 1
        %s305 = scalar_select %p304, %s29, 1
        %s306 = smul.addr %s305, 32
        %s307 = smul.addr %s306, 8
        %s308 = scalar_lea.vmem %s4, %s307
        %p309 = scmp.eq.s32.totalorder %s30, 0
        // Predicated region
        $region41: #{tpu_custom_call.1} parent=31 // pred_check
          %p310 = pneg %p309
        $region42: #{tpu_custom_call.1} parent=31 // pred_check_branch
          %312 = sbr.rel (%p310) target = $region44
        $region43: #{tpu_custom_call.1} parent=31 // pred_region
          %vm313 = vcmask 7168
          %314 = vst.msk [vmem:[%s308] sm:$0xff] %vm313, 0.0
          %315 = vst.msk [vmem:[%s308 + $0x8] sm:$0xff] %vm313, 0.0
          %316 = vst.msk [vmem:[%s308 + $0x10] sm:$0xff] %vm313, 0.0
          %317 = vst.msk [vmem:[%s308 + $0x18] sm:$0xff] %vm313, 0.0
          %318 = vst.msk [vmem:[%s308 + $0x20] sm:$0xff] %vm313, 0.0
          %319 = vst.msk [vmem:[%s308 + $0x28] sm:$0xff] %vm313, 0.0
          %320 = vst.msk [vmem:[%s308 + $0x30] sm:$0xff] %vm313, 0.0
          %321 = vst.msk [vmem:[%s308 + $0x38] sm:$0xff] %vm313, 0.0
          %322 = vst.msk [vmem:[%s308 + $0x40] sm:$0xff] %vm313, 0.0
          %323 = vst.msk [vmem:[%s308 + $0x48] sm:$0xff] %vm313, 0.0
          %324 = vst.msk [vmem:[%s308 + $0x50] sm:$0xff] %vm313, 0.0
          %325 = vst.msk [vmem:[%s308 + $0x58] sm:$0xff] %vm313, 0.0
          %326 = vst.msk [vmem:[%s308 + $0x60] sm:$0xff] %vm313, 0.0
          %327 = vst.msk [vmem:[%s308 + $0x68] sm:$0xff] %vm313, 0.0
          %328 = vst.msk [vmem:[%s308 + $0x70] sm:$0xff] %vm313, 0.0
          %329 = vst.msk [vmem:[%s308 + $0x78] sm:$0xff] %vm313, 0.0
          %330 = vst.msk [vmem:[%s308 + $0x80] sm:$0xff] %vm313, 0.0
          %331 = vst.msk [vmem:[%s308 + $0x88] sm:$0xff] %vm313, 0.0
          %332 = vst.msk [vmem:[%s308 + $0x90] sm:$0xff] %vm313, 0.0
          %333 = vst.msk [vmem:[%s308 + $0x98] sm:$0xff] %vm313, 0.0
          %334 = vst.msk [vmem:[%s308 + $0xa0] sm:$0xff] %vm313, 0.0
          %335 = vst.msk [vmem:[%s308 + $0xa8] sm:$0xff] %vm313, 0.0
          %336 = vst.msk [vmem:[%s308 + $0xb0] sm:$0xff] %vm313, 0.0
          %337 = vst.msk [vmem:[%s308 + $0xb8] sm:$0xff] %vm313, 0.0
          %338 = vst.msk [vmem:[%s308 + $0xc0] sm:$0xff] %vm313, 0.0
          %339 = vst.msk [vmem:[%s308 + $0xc8] sm:$0xff] %vm313, 0.0
          %340 = vst.msk [vmem:[%s308 + $0xd0] sm:$0xff] %vm313, 0.0
          %341 = vst.msk [vmem:[%s308 + $0xd8] sm:$0xff] %vm313, 0.0
          %342 = vst.msk [vmem:[%s308 + $0xe0] sm:$0xff] %vm313, 0.0
          %343 = vst.msk [vmem:[%s308 + $0xe8] sm:$0xff] %vm313, 0.0
          %344 = vst.msk [vmem:[%s308 + $0xf0] sm:$0xff] %vm313, 0.0
          %345 = vst.msk [vmem:[%s308 + $0xf8] sm:$0xff] %vm313, 0.0
        $region44: #{tpu_custom_call.1} parent=31 // pred_fallthru
          _
        %v346 = vld [vmem:[%s248] sm:$0xff]
        %v347 = vld [vmem:[%s248 + $0x8] sm:$0xff]
        %v348 = vld [vmem:[%s248 + $0x10] sm:$0xff]
        %v349 = vld [vmem:[%s248 + $0x18] sm:$0xff]
        %v350 = vld [vmem:[%s248 + $0x20] sm:$0xff]
        %v351 = vld [vmem:[%s248 + $0x28] sm:$0xff]
        %v352 = vld [vmem:[%s248 + $0x30] sm:$0xff]
        %v353 = vld [vmem:[%s248 + $0x38] sm:$0xff]
        %v354 = vld [vmem:[%s248 + $0x40] sm:$0xff]
        %v355 = vld [vmem:[%s248 + $0x48] sm:$0xff]
        %v356 = vld [vmem:[%s248 + $0x50] sm:$0xff]
        %v357 = vld [vmem:[%s248 + $0x58] sm:$0xff]
        %v358 = vld [vmem:[%s248 + $0x60] sm:$0xff]
        %v359 = vld [vmem:[%s248 + $0x68] sm:$0xff]
        %v360 = vld [vmem:[%s248 + $0x70] sm:$0xff]
        %v361 = vld [vmem:[%s248 + $0x78] sm:$0xff]
        %v362 = vld [vmem:[%s248 + $0x80] sm:$0xff]
        %v363 = vld [vmem:[%s248 + $0x88] sm:$0xff]
        %v364 = vld [vmem:[%s248 + $0x90] sm:$0xff]
        %v365 = vld [vmem:[%s248 + $0x98] sm:$0xff]
        %v366 = vld [vmem:[%s248 + $0xa0] sm:$0xff]
        %v367 = vld [vmem:[%s248 + $0xa8] sm:$0xff]
        %v368 = vld [vmem:[%s248 + $0xb0] sm:$0xff]
        %v369 = vld [vmem:[%s248 + $0xb8] sm:$0xff]
        %v370 = vld [vmem:[%s248 + $0xc0] sm:$0xff]
        %v371 = vld [vmem:[%s248 + $0xc8] sm:$0xff]
        %v372 = vld [vmem:[%s248 + $0xd0] sm:$0xff]
        %v373 = vld [vmem:[%s248 + $0xd8] sm:$0xff]
        %v374 = vld [vmem:[%s248 + $0xe0] sm:$0xff]
        %v375 = vld [vmem:[%s248 + $0xe8] sm:$0xff]
        %v376 = vld [vmem:[%s248 + $0xf0] sm:$0xff]
        %v377 = vld [vmem:[%s248 + $0xf8] sm:$0xff]
        %v378 = vld [vmem:[%s248 + $0x100] sm:$0xff]
        %v379 = vld [vmem:[%s248 + $0x108] sm:$0xff]
        %v380 = vld [vmem:[%s248 + $0x110] sm:$0xff]
        %v381 = vld [vmem:[%s248 + $0x118] sm:$0xff]
        %v382 = vld [vmem:[%s248 + $0x120] sm:$0xff]
        %v383 = vld [vmem:[%s248 + $0x128] sm:$0xff]
        %v384 = vld [vmem:[%s248 + $0x130] sm:$0xff]
        %v385 = vld [vmem:[%s248 + $0x138] sm:$0xff]
        %v386 = vld [vmem:[%s248 + $0x140] sm:$0xff]
        %v387 = vld [vmem:[%s248 + $0x148] sm:$0xff]
        %v388 = vld [vmem:[%s248 + $0x150] sm:$0xff]
        %v389 = vld [vmem:[%s248 + $0x158] sm:$0xff]
        %v390 = vld [vmem:[%s248 + $0x160] sm:$0xff]
        %v391 = vld [vmem:[%s248 + $0x168] sm:$0xff]
        %v392 = vld [vmem:[%s248 + $0x170] sm:$0xff]
        %v393 = vld [vmem:[%s248 + $0x178] sm:$0xff]
        %v394 = vld [vmem:[%s248 + $0x180] sm:$0xff]
        %v395 = vld [vmem:[%s248 + $0x188] sm:$0xff]
        %v396 = vld [vmem:[%s248 + $0x190] sm:$0xff]
        %v397 = vld [vmem:[%s248 + $0x198] sm:$0xff]
        %v398 = vld [vmem:[%s248 + $0x1a0] sm:$0xff]
        %v399 = vld [vmem:[%s248 + $0x1a8] sm:$0xff]
        %v400 = vld [vmem:[%s248 + $0x1b0] sm:$0xff]
        %v401 = vld [vmem:[%s248 + $0x1b8] sm:$0xff]
        %v402 = vld [vmem:[%s248 + $0x1c0] sm:$0xff]
        %v403 = vld [vmem:[%s248 + $0x1c8] sm:$0xff]
        %v404 = vld [vmem:[%s248 + $0x1d0] sm:$0xff]
        %v405 = vld [vmem:[%s248 + $0x1d8] sm:$0xff]
        %v406 = vld [vmem:[%s248 + $0x1e0] sm:$0xff]
        %v407 = vld [vmem:[%s248 + $0x1e8] sm:$0xff]
        %v408 = vld [vmem:[%s248 + $0x1f0] sm:$0xff]
        %v409 = vld [vmem:[%s248 + $0x1f8] sm:$0xff]
        %v410 = vld [vmem:[%s257] sm:$0xff]
        %v411 = vld [vmem:[%s257 + $0x8] sm:$0xff]
        %v412 = vld [vmem:[%s257 + $0x10] sm:$0xff]
        %v413 = vld [vmem:[%s257 + $0x18] sm:$0xff]
        %v414 = vld [vmem:[%s257 + $0x20] sm:$0xff]
        %v415 = vld [vmem:[%s257 + $0x28] sm:$0xff]
        %v416 = vld [vmem:[%s257 + $0x30] sm:$0xff]
        %v417 = vld [vmem:[%s257 + $0x38] sm:$0xff]
        %418 = vmatprep.subr.mxu0 %v347
        %419 = vmatpush1.msra.mxu0 %v346
        %420 = vmatprep.subr.mxu0 %v349
        %421 = vmatpush1.msra.mxu0 %v348
        %422 = vmatprep.subr.mxu0 %v351
        %423 = vmatpush1.msra.mxu0 %v350
        %424 = vmatprep.subr.mxu0 %v353
        %425 = vmatpush1.msra.mxu0 %v352
        %426 = vmatprep.subr.mxu0 %v355
        %427 = vmatpush1.msra.mxu0 %v354
        %428 = vmatprep.subr.mxu0 %v357
        %429 = vmatpush1.msra.mxu0 %v356
        %430 = vmatprep.subr.mxu0 %v359
        %431 = vmatpush1.msra.mxu0 %v358
        %432 = vmatprep.subr.mxu0 %v361
        %433 = vmatpush1.msra.mxu0 %v360
        %434 = vmatprep.subr.mxu0 %v363
        %435 = vmatpush1.msra.mxu0 %v362
        %436 = vmatprep.subr.mxu0 %v365
        %437 = vmatpush1.msra.mxu0 %v364
        %438 = vmatprep.subr.mxu0 %v367
        %439 = vmatpush1.msra.mxu0 %v366
        %440 = vmatprep.subr.mxu0 %v369
        %441 = vmatpush1.msra.mxu0 %v368
        %442 = vmatprep.subr.mxu0 %v371
        %443 = vmatpush1.msra.mxu0 %v370
        %444 = vmatprep.subr.mxu0 %v373
        %445 = vmatpush1.msra.mxu0 %v372
        %446 = vmatprep.subr.mxu0 %v375
        %447 = vmatpush1.msra.mxu0 %v374
        %448 = vmatprep.subr.mxu0 %v377
        %449 = vmatpush1.msra.mxu0 %v376
        %450 = vmatprep.subr.mxu0 %v379
        %451 = vmatpush1.msra.mxu0 %v378
        %452 = vmatprep.subr.mxu0 %v381
        %453 = vmatpush1.msra.mxu0 %v380
        %454 = vmatprep.subr.mxu0 %v383
        %455 = vmatpush1.msra.mxu0 %v382
        %456 = vmatprep.subr.mxu0 %v385
        %457 = vmatpush1.msra.mxu0 %v384
        %458 = vmatprep.subr.mxu0 %v387
        %459 = vmatpush1.msra.mxu0 %v386
        %460 = vmatprep.subr.mxu0 %v389
        %461 = vmatpush1.msra.mxu0 %v388
        %462 = vmatprep.subr.mxu0 %v391
        %463 = vmatpush1.msra.mxu0 %v390
        %464 = vmatprep.subr.mxu0 %v393
        %465 = vmatpush1.msra.mxu0 %v392
        %466 = vmatprep.subr.mxu0 %v395
        %467 = vmatpush1.msra.mxu0 %v394
        %468 = vmatprep.subr.mxu0 %v397
        %469 = vmatpush1.msra.mxu0 %v396
        %470 = vmatprep.subr.mxu0 %v399
        %471 = vmatpush1.msra.mxu0 %v398
        %472 = vmatprep.subr.mxu0 %v401
        %473 = vmatpush1.msra.mxu0 %v400
        %474 = vmatprep.subr.mxu0 %v403
        %475 = vmatpush1.msra.mxu0 %v402
        %476 = vmatprep.subr.mxu0 %v405
        %477 = vmatpush1.msra.mxu0 %v404
        %478 = vmatprep.subr.mxu0 %v407
        %479 = vmatpush1.msra.mxu0 %v406
        %480 = vmatprep.subr.mxu0 %v409
        %481 = vmatpush1.msra.mxu0 %v408
        %482 = vmatprep.mubr.f32.mxu0 %v411
        %483 = vmatmul.mubr.f32.gmra.mrb[0].mxu0 %v410
        %v484 = vpop.f32.mrb[0].mxu0
        %v485 = vadd.f32 0.0, %v484
        %v486 = vpop.f32.mrb[0].mxu0
        %v487 = vadd.f32 0.0, %v486
        %488 = vmatprep.mubr.f32.mxu0 %v413
        %489 = vmatmul.mubr.f32.gmra.mrb[0].mxu0 %v412
        %v490 = vpop.f32.mrb[0].mxu0
        %v491 = vadd.f32 0.0, %v490
        %v492 = vpop.f32.mrb[0].mxu0
        %v493 = vadd.f32 0.0, %v492
        %494 = vmatprep.mubr.f32.mxu0 %v415
        %495 = vmatmul.mubr.f32.gmra.mrb[0].mxu0 %v414
        %v496 = vpop.f32.mrb[0].mxu0
        %v497 = vadd.f32 0.0, %v496
        %v498 = vpop.f32.mrb[0].mxu0
        %v499 = vadd.f32 0.0, %v498
        %500 = vmatprep.mubr.f32.mxu0 %v417
        %501 = vmatmul.mubr.f32.gmra.mrb[0].mxu0 %v416
        %v502 = vpop.f32.mrb[0].mxu0
        %v503 = vadd.f32 0.0, %v502
        %v504 = vpop.f32.mrb[0].mxu0
        %v505 = vadd.f32 0.0, %v504
        %506 = vdwg.mxu0
        %v507 = vmax.f32 %v485, 0.0
        %v508 = vmax.f32 %v487, 0.0
        %v509 = vmax.f32 %v491, 0.0
        %v510 = vmax.f32 %v493, 0.0
        %v511 = vmax.f32 %v497, 0.0
        %v512 = vmax.f32 %v499, 0.0
        %v513 = vmax.f32 %v503, 0.0
        %v514 = vmax.f32 %v505, 0.0
        %v515 = vld [vmem:[%s302] sm:$0xff]
        %v516 = vld [vmem:[%s302 + $0x8] sm:$0xff]
        %v517 = vld [vmem:[%s302 + $0x10] sm:$0xff]
        %v518 = vld [vmem:[%s302 + $0x18] sm:$0xff]
        %520 = vset.pattern.permute.xlu0 0
        %521 = vperm.xlu0 %520, %v515
        %v522 = vpop.permute.xlu0 %521
        %525 = vset.pattern.permute.xlu0 0
        %526 = vperm.xlu0 %525, %v516
        %v527 = vpop.permute.xlu0 %526
        %530 = vset.pattern.permute.xlu0 0
        %531 = vperm.xlu0 %530, %v517
        %v532 = vpop.permute.xlu0 %531
        %535 = vset.pattern.permute.xlu0 0
        %536 = vperm.xlu0 %535, %v518
        %v537 = vpop.permute.xlu0 %536
        %v539 = vmul.f32 %v507, %v522
        %v540 = vmul.f32 %v508, %v522
        %v541 = vmul.f32 %v509, %v527
        %v542 = vmul.f32 %v510, %v527
        %v543 = vmul.f32 %v511, %v532
        %v544 = vmul.f32 %v512, %v532
        %v545 = vmul.f32 %v513, %v537
        %v546 = vmul.f32 %v514, %v537
        %v547 = vadd.f32 %v539, %v541
        %v548 = vadd.f32 %v547, %v543
        %v549 = vadd.f32 %v548, %v545
        %v550 = vrot.slane %v549, 4
        %v551 = vadd.f32 %v549, %v550
        %v552 = vrot.slane %v551, 2
        %v553 = vadd.f32 %v551, %v552
        %v554 = vrot.slane %v553, 1
        %v555 = vadd.f32 %v553, %v554
        %v556 = vadd.f32 %v540, %v542
        %v557 = vadd.f32 %v556, %v544
        %v558 = vadd.f32 %v557, %v546
        %v559 = vrot.slane %v558, 4
        %v560 = vadd.f32 %v558, %v559
        %v561 = vrot.slane %v560, 2
        %v562 = vadd.f32 %v560, %v561
        %v563 = vrot.slane %v562, 1
        %v564 = vadd.f32 %v562, %v563
        %v565 = vsub.f32 0.0, %v555
        %v566 = vsub.f32 0.0, %v564
        %v567 = vmul.f32 %v565, 1.442695
        %v568 = vpow.pop %v567
        %v569 = vmul.f32 %v566, 1.442695
        %v570 = vpow.pop %v569
        %v571 = vadd.f32 %v568, 1.0
        %v572 = vadd.f32 %v570, 1.0
        %v573 = vrcp.pop %v571
        %v574 = vrcp.pop %v572
        %v577 = vcombine.low %v573, %v574
        %v579 = vunpack.c.l.s4 1966171168
        %v580 = vunpack.c.0.s8 %v579
        %v581 = vlaneseq
        %v582 = vshrl.u32 %v581, 7
        %v583 = vsub.s32 %v580, %v582
        %v584 = vrot.slane %v577, %v583
        %v586 = vunpack.c.l.s4 1966171168
        %v587 = vunpack.c.0.s8 %v586
        %v588 = vlaneseq
        %v589 = vshrl.u32 %v588, 7
        %v590 = vsub.s32 %v587, %v589
        %v591 = vrot.slane %v584, %v590
        %v593 = vlaneseq
        %vm594 = vcmp.ge.s32.totalorder %v593, 0
        %vm595 = vcmp.lt.s32.totalorder %v593, 256
        %vm596 = vmand %vm594, %vm595
        %597 = vst.msk [vmem:[%s289] sm:$0x3] %vm596, %v591
        %v598 = vmul.f32 %v573, %v346
        %v599 = vmul.f32 %v574, %v347
        %v600 = vmul.f32 %v573, %v348
        %v601 = vmul.f32 %v574, %v349
        %v602 = vmul.f32 %v573, %v350
        %v603 = vmul.f32 %v574, %v351
        %v604 = vmul.f32 %v573, %v352
        %v605 = vmul.f32 %v574, %v353
        %v606 = vmul.f32 %v573, %v354
        %v607 = vmul.f32 %v574, %v355
        %v608 = vmul.f32 %v573, %v356
        %v609 = vmul.f32 %v574, %v357
        %v610 = vmul.f32 %v573, %v358
        %v611 = vmul.f32 %v574, %v359
        %v612 = vmul.f32 %v573, %v360
        %v613 = vmul.f32 %v574, %v361
        %v614 = vmul.f32 %v573, %v362
        %v615 = vmul.f32 %v574, %v363
        %v616 = vmul.f32 %v573, %v364
        %v617 = vmul.f32 %v574, %v365
        %v618 = vmul.f32 %v573, %v366
        %v619 = vmul.f32 %v574, %v367
        %v620 = vmul.f32 %v573, %v368
        %v621 = vmul.f32 %v574, %v369
        %v622 = vmul.f32 %v573, %v370
        %v623 = vmul.f32 %v574, %v371
        %v624 = vmul.f32 %v573, %v372
        %v625 = vmul.f32 %v574, %v373
        %v626 = vmul.f32 %v573, %v374
        %v627 = vmul.f32 %v574, %v375
        %v628 = vmul.f32 %v573, %v376
        %v629 = vmul.f32 %v574, %v377
        %v630 = vmul.f32 %v573, %v378
        %v631 = vmul.f32 %v574, %v379
        %v632 = vmul.f32 %v573, %v380
        %v633 = vmul.f32 %v574, %v381
        %v634 = vmul.f32 %v573, %v382
        %v635 = vmul.f32 %v574, %v383
        %v636 = vmul.f32 %v573, %v384
        %v637 = vmul.f32 %v574, %v385
        %v638 = vmul.f32 %v573, %v386
        %v639 = vmul.f32 %v574, %v387
        %v640 = vmul.f32 %v573, %v388
        %v641 = vmul.f32 %v574, %v389
        %v642 = vmul.f32 %v573, %v390
        %v643 = vmul.f32 %v574, %v391
        %v644 = vmul.f32 %v573, %v392
        %v645 = vmul.f32 %v574, %v393
        %v646 = vmul.f32 %v573, %v394
        %v647 = vmul.f32 %v574, %v395
        %v648 = vmul.f32 %v573, %v396
        %v649 = vmul.f32 %v574, %v397
        %v650 = vmul.f32 %v573, %v398
        %v651 = vmul.f32 %v574, %v399
        %v652 = vmul.f32 %v573, %v400
        %v653 = vmul.f32 %v574, %v401
        %v654 = vmul.f32 %v573, %v402
        %v655 = vmul.f32 %v574, %v403
        %v656 = vmul.f32 %v573, %v404
        %v657 = vmul.f32 %v574, %v405
        %v658 = vmul.f32 %v573, %v406
        %v659 = vmul.f32 %v574, %v407
        %v660 = vmul.f32 %v573, %v408
        %v661 = vmul.f32 %v574, %v409
        %v662 = vadd.f32 %v598, %v599
        %663 = vadd.xlane.f32.xlu0 %v662
        %v664 = vpop.xlane.xlu0 %663
        %v665 = vadd.f32 %v600, %v601
        %666 = vadd.xlane.f32.xlu0 %v665
        %v667 = vpop.xlane.xlu0 %666
        %v668 = vadd.f32 %v602, %v603
        %669 = vadd.xlane.f32.xlu0 %v668
        %v670 = vpop.xlane.xlu0 %669
        %v671 = vadd.f32 %v604, %v605
        %672 = vadd.xlane.f32.xlu0 %v671
        %v673 = vpop.xlane.xlu0 %672
        %v674 = vadd.f32 %v606, %v607
        %675 = vadd.xlane.f32.xlu0 %v674
        %v676 = vpop.xlane.xlu0 %675
        %v677 = vadd.f32 %v608, %v609
        %678 = vadd.xlane.f32.xlu0 %v677
        %v679 = vpop.xlane.xlu0 %678
        %v680 = vadd.f32 %v610, %v611
        %681 = vadd.xlane.f32.xlu0 %v680
        %v682 = vpop.xlane.xlu0 %681
        %v683 = vadd.f32 %v612, %v613
        %684 = vadd.xlane.f32.xlu0 %v683
        %v685 = vpop.xlane.xlu0 %684
        %v686 = vadd.f32 %v614, %v615
        %687 = vadd.xlane.f32.xlu0 %v686
        %v688 = vpop.xlane.xlu0 %687
        %v689 = vadd.f32 %v616, %v617
        %690 = vadd.xlane.f32.xlu0 %v689
        %v691 = vpop.xlane.xlu0 %690
        %v692 = vadd.f32 %v618, %v619
        %693 = vadd.xlane.f32.xlu0 %v692
        %v694 = vpop.xlane.xlu0 %693
        %v695 = vadd.f32 %v620, %v621
        %696 = vadd.xlane.f32.xlu0 %v695
        %v697 = vpop.xlane.xlu0 %696
        %v698 = vadd.f32 %v622, %v623
        %699 = vadd.xlane.f32.xlu0 %v698
        %v700 = vpop.xlane.xlu0 %699
        %v701 = vadd.f32 %v624, %v625
        %702 = vadd.xlane.f32.xlu0 %v701
        %v703 = vpop.xlane.xlu0 %702
        %v704 = vadd.f32 %v626, %v627
        %705 = vadd.xlane.f32.xlu0 %v704
        %v706 = vpop.xlane.xlu0 %705
        %v707 = vadd.f32 %v628, %v629
        %708 = vadd.xlane.f32.xlu0 %v707
        %v709 = vpop.xlane.xlu0 %708
        %v710 = vadd.f32 %v630, %v631
        %711 = vadd.xlane.f32.xlu0 %v710
        %v712 = vpop.xlane.xlu0 %711
        %v713 = vadd.f32 %v632, %v633
        %714 = vadd.xlane.f32.xlu0 %v713
        %v715 = vpop.xlane.xlu0 %714
        %v716 = vadd.f32 %v634, %v635
        %717 = vadd.xlane.f32.xlu0 %v716
        %v718 = vpop.xlane.xlu0 %717
        %v719 = vadd.f32 %v636, %v637
        %720 = vadd.xlane.f32.xlu0 %v719
        %v721 = vpop.xlane.xlu0 %720
        %v722 = vadd.f32 %v638, %v639
        %723 = vadd.xlane.f32.xlu0 %v722
        %v724 = vpop.xlane.xlu0 %723
        %v725 = vadd.f32 %v640, %v641
        %726 = vadd.xlane.f32.xlu0 %v725
        %v727 = vpop.xlane.xlu0 %726
        %v728 = vadd.f32 %v642, %v643
        %729 = vadd.xlane.f32.xlu0 %v728
        %v730 = vpop.xlane.xlu0 %729
        %v731 = vadd.f32 %v644, %v645
        %732 = vadd.xlane.f32.xlu0 %v731
        %v733 = vpop.xlane.xlu0 %732
        %v734 = vadd.f32 %v646, %v647
        %735 = vadd.xlane.f32.xlu0 %v734
        %v736 = vpop.xlane.xlu0 %735
        %v737 = vadd.f32 %v648, %v649
        %738 = vadd.xlane.f32.xlu0 %v737
        %v739 = vpop.xlane.xlu0 %738
        %v740 = vadd.f32 %v650, %v651
        %741 = vadd.xlane.f32.xlu0 %v740
        %v742 = vpop.xlane.xlu0 %741
        %v743 = vadd.f32 %v652, %v653
        %744 = vadd.xlane.f32.xlu0 %v743
        %v745 = vpop.xlane.xlu0 %744
        %v746 = vadd.f32 %v654, %v655
        %747 = vadd.xlane.f32.xlu0 %v746
        %v748 = vpop.xlane.xlu0 %747
        %v749 = vadd.f32 %v656, %v657
        %750 = vadd.xlane.f32.xlu0 %v749
        %v751 = vpop.xlane.xlu0 %750
        %v752 = vadd.f32 %v658, %v659
        %753 = vadd.xlane.f32.xlu0 %v752
        %v754 = vpop.xlane.xlu0 %753
        %v755 = vadd.f32 %v660, %v661
        %756 = vadd.xlane.f32.xlu0 %v755
        %v757 = vpop.xlane.xlu0 %756
        %v758 = vld [vmem:[%s308] sm:$0xff]
        %v759 = vld [vmem:[%s308 + $0x8] sm:$0xff]
        %v760 = vld [vmem:[%s308 + $0x10] sm:$0xff]
        %v761 = vld [vmem:[%s308 + $0x18] sm:$0xff]
        %v762 = vld [vmem:[%s308 + $0x20] sm:$0xff]
        %v763 = vld [vmem:[%s308 + $0x28] sm:$0xff]
        %v764 = vld [vmem:[%s308 + $0x30] sm:$0xff]
        %v765 = vld [vmem:[%s308 + $0x38] sm:$0xff]
        %v766 = vld [vmem:[%s308 + $0x40] sm:$0xff]
        %v767 = vld [vmem:[%s308 + $0x48] sm:$0xff]
        %v768 = vld [vmem:[%s308 + $0x50] sm:$0xff]
        %v769 = vld [vmem:[%s308 + $0x58] sm:$0xff]
        %v770 = vld [vmem:[%s308 + $0x60] sm:$0xff]
        %v771 = vld [vmem:[%s308 + $0x68] sm:$0xff]
        %v772 = vld [vmem:[%s308 + $0x70] sm:$0xff]
        %v773 = vld [vmem:[%s308 + $0x78] sm:$0xff]
        %v774 = vld [vmem:[%s308 + $0x80] sm:$0xff]
        %v775 = vld [vmem:[%s308 + $0x88] sm:$0xff]
        %v776 = vld [vmem:[%s308 + $0x90] sm:$0xff]
        %v777 = vld [vmem:[%s308 + $0x98] sm:$0xff]
        %v778 = vld [vmem:[%s308 + $0xa0] sm:$0xff]
        %v779 = vld [vmem:[%s308 + $0xa8] sm:$0xff]
        %v780 = vld [vmem:[%s308 + $0xb0] sm:$0xff]
        %v781 = vld [vmem:[%s308 + $0xb8] sm:$0xff]
        %v782 = vld [vmem:[%s308 + $0xc0] sm:$0xff]
        %v783 = vld [vmem:[%s308 + $0xc8] sm:$0xff]
        %v784 = vld [vmem:[%s308 + $0xd0] sm:$0xff]
        %v785 = vld [vmem:[%s308 + $0xd8] sm:$0xff]
        %v786 = vld [vmem:[%s308 + $0xe0] sm:$0xff]
        %v787 = vld [vmem:[%s308 + $0xe8] sm:$0xff]
        %v788 = vld [vmem:[%s308 + $0xf0] sm:$0xff]
        %v789 = vld [vmem:[%s308 + $0xf8] sm:$0xff]
        %v790 = vadd.f32 %v758, %v664
        %v791 = vadd.f32 %v759, %v667
        %v792 = vadd.f32 %v760, %v670
        %v793 = vadd.f32 %v761, %v673
        %v794 = vadd.f32 %v762, %v676
        %v795 = vadd.f32 %v763, %v679
        %v796 = vadd.f32 %v764, %v682
        %v797 = vadd.f32 %v765, %v685
        %v798 = vadd.f32 %v766, %v688
        %v799 = vadd.f32 %v767, %v691
        %v800 = vadd.f32 %v768, %v694
        %v801 = vadd.f32 %v769, %v697
        %v802 = vadd.f32 %v770, %v700
        %v803 = vadd.f32 %v771, %v703
        %v804 = vadd.f32 %v772, %v706
        %v805 = vadd.f32 %v773, %v709
        %v806 = vadd.f32 %v774, %v712
        %v807 = vadd.f32 %v775, %v715
        %v808 = vadd.f32 %v776, %v718
        %v809 = vadd.f32 %v777, %v721
        %v810 = vadd.f32 %v778, %v724
        %v811 = vadd.f32 %v779, %v727
        %v812 = vadd.f32 %v780, %v730
        %v813 = vadd.f32 %v781, %v733
        %v814 = vadd.f32 %v782, %v736
        %v815 = vadd.f32 %v783, %v739
        %v816 = vadd.f32 %v784, %v742
        %v817 = vadd.f32 %v785, %v745
        %v818 = vadd.f32 %v786, %v748
        %v819 = vadd.f32 %v787, %v751
        %v820 = vadd.f32 %v788, %v754
        %v821 = vadd.f32 %v789, %v757
        %vm822 = vcmask 7168
        %823 = vst.msk [vmem:[%s308] sm:$0xff] %vm822, %v790
        %824 = vst.msk [vmem:[%s308 + $0x8] sm:$0xff] %vm822, %v791
        %825 = vst.msk [vmem:[%s308 + $0x10] sm:$0xff] %vm822, %v792
        %826 = vst.msk [vmem:[%s308 + $0x18] sm:$0xff] %vm822, %v793
        %827 = vst.msk [vmem:[%s308 + $0x20] sm:$0xff] %vm822, %v794
        %828 = vst.msk [vmem:[%s308 + $0x28] sm:$0xff] %vm822, %v795
        %829 = vst.msk [vmem:[%s308 + $0x30] sm:$0xff] %vm822, %v796
        %830 = vst.msk [vmem:[%s308 + $0x38] sm:$0xff] %vm822, %v797
        %831 = vst.msk [vmem:[%s308 + $0x40] sm:$0xff] %vm822, %v798
        %832 = vst.msk [vmem:[%s308 + $0x48] sm:$0xff] %vm822, %v799
        %833 = vst.msk [vmem:[%s308 + $0x50] sm:$0xff] %vm822, %v800
        %834 = vst.msk [vmem:[%s308 + $0x58] sm:$0xff] %vm822, %v801
        %835 = vst.msk [vmem:[%s308 + $0x60] sm:$0xff] %vm822, %v802
        %836 = vst.msk [vmem:[%s308 + $0x68] sm:$0xff] %vm822, %v803
        %837 = vst.msk [vmem:[%s308 + $0x70] sm:$0xff] %vm822, %v804
        %838 = vst.msk [vmem:[%s308 + $0x78] sm:$0xff] %vm822, %v805
        %839 = vst.msk [vmem:[%s308 + $0x80] sm:$0xff] %vm822, %v806
        %840 = vst.msk [vmem:[%s308 + $0x88] sm:$0xff] %vm822, %v807
        %841 = vst.msk [vmem:[%s308 + $0x90] sm:$0xff] %vm822, %v808
        %842 = vst.msk [vmem:[%s308 + $0x98] sm:$0xff] %vm822, %v809
        %843 = vst.msk [vmem:[%s308 + $0xa0] sm:$0xff] %vm822, %v810
        %844 = vst.msk [vmem:[%s308 + $0xa8] sm:$0xff] %vm822, %v811
        %845 = vst.msk [vmem:[%s308 + $0xb0] sm:$0xff] %vm822, %v812
        %846 = vst.msk [vmem:[%s308 + $0xb8] sm:$0xff] %vm822, %v813
        %847 = vst.msk [vmem:[%s308 + $0xc0] sm:$0xff] %vm822, %v814
        %848 = vst.msk [vmem:[%s308 + $0xc8] sm:$0xff] %vm822, %v815
        %849 = vst.msk [vmem:[%s308 + $0xd0] sm:$0xff] %vm822, %v816
        %850 = vst.msk [vmem:[%s308 + $0xd8] sm:$0xff] %vm822, %v817
        %851 = vst.msk [vmem:[%s308 + $0xe0] sm:$0xff] %vm822, %v818
        %852 = vst.msk [vmem:[%s308 + $0xe8] sm:$0xff] %vm822, %v819
        %853 = vst.msk [vmem:[%s308 + $0xf0] sm:$0xff] %vm822, %v820
        %854 = vst.msk [vmem:[%s308 + $0xf8] sm:$0xff] %vm822, %v821
        // Predicated region
        $region45: #{tpu_custom_call.1} parent=31 // pred_check
          %p855 = pneg %p309
        $region46: #{tpu_custom_call.1} parent=31 // pred_check_branch
          %857 = sbr.rel (%p855) target = $region48
        $region47: #{tpu_custom_call.1} parent=31 // pred_region
          %v858 = vld [vmem:[%s308] sm:$0xff]
          %v859 = vld [vmem:[%s308 + $0x8] sm:$0xff]
          %v860 = vld [vmem:[%s308 + $0x10] sm:$0xff]
          %v861 = vld [vmem:[%s308 + $0x18] sm:$0xff]
          %v862 = vld [vmem:[%s308 + $0x20] sm:$0xff]
          %v863 = vld [vmem:[%s308 + $0x28] sm:$0xff]
          %v864 = vld [vmem:[%s308 + $0x30] sm:$0xff]
          %v865 = vld [vmem:[%s308 + $0x38] sm:$0xff]
          %v866 = vld [vmem:[%s308 + $0x40] sm:$0xff]
          %v867 = vld [vmem:[%s308 + $0x48] sm:$0xff]
          %v868 = vld [vmem:[%s308 + $0x50] sm:$0xff]
          %v869 = vld [vmem:[%s308 + $0x58] sm:$0xff]
          %v870 = vld [vmem:[%s308 + $0x60] sm:$0xff]
          %v871 = vld [vmem:[%s308 + $0x68] sm:$0xff]
          %v872 = vld [vmem:[%s308 + $0x70] sm:$0xff]
          %v873 = vld [vmem:[%s308 + $0x78] sm:$0xff]
          %v874 = vld [vmem:[%s308 + $0x80] sm:$0xff]
          %v875 = vld [vmem:[%s308 + $0x88] sm:$0xff]
          %v876 = vld [vmem:[%s308 + $0x90] sm:$0xff]
          %v877 = vld [vmem:[%s308 + $0x98] sm:$0xff]
          %v878 = vld [vmem:[%s308 + $0xa0] sm:$0xff]
          %v879 = vld [vmem:[%s308 + $0xa8] sm:$0xff]
          %v880 = vld [vmem:[%s308 + $0xb0] sm:$0xff]
          %v881 = vld [vmem:[%s308 + $0xb8] sm:$0xff]
          %v882 = vld [vmem:[%s308 + $0xc0] sm:$0xff]
          %v883 = vld [vmem:[%s308 + $0xc8] sm:$0xff]
          %v884 = vld [vmem:[%s308 + $0xd0] sm:$0xff]
          %v885 = vld [vmem:[%s308 + $0xd8] sm:$0xff]
          %v886 = vld [vmem:[%s308 + $0xe0] sm:$0xff]
          %v887 = vld [vmem:[%s308 + $0xe8] sm:$0xff]
          %v888 = vld [vmem:[%s308 + $0xf0] sm:$0xff]
          %v889 = vld [vmem:[%s308 + $0xf8] sm:$0xff]
          %v890 = vmul.f32 %v858, 0.00390625
          %v891 = vmul.f32 %v859, 0.00390625
          %v892 = vmul.f32 %v860, 0.00390625
          %v893 = vmul.f32 %v861, 0.00390625
          %v894 = vmul.f32 %v862, 0.00390625
          %v895 = vmul.f32 %v863, 0.00390625
          %v896 = vmul.f32 %v864, 0.00390625
          %v897 = vmul.f32 %v865, 0.00390625
          %v898 = vmul.f32 %v866, 0.00390625
          %v899 = vmul.f32 %v867, 0.00390625
          %v900 = vmul.f32 %v868, 0.00390625
          %v901 = vmul.f32 %v869, 0.00390625
          %v902 = vmul.f32 %v870, 0.00390625
          %v903 = vmul.f32 %v871, 0.00390625
          %v904 = vmul.f32 %v872, 0.00390625
          %v905 = vmul.f32 %v873, 0.00390625
          %v906 = vmul.f32 %v874, 0.00390625
          %v907 = vmul.f32 %v875, 0.00390625
          %v908 = vmul.f32 %v876, 0.00390625
          %v909 = vmul.f32 %v877, 0.00390625
          %v910 = vmul.f32 %v878, 0.00390625
          %v911 = vmul.f32 %v879, 0.00390625
          %v912 = vmul.f32 %v880, 0.00390625
          %v913 = vmul.f32 %v881, 0.00390625
          %v914 = vmul.f32 %v882, 0.00390625
          %v915 = vmul.f32 %v883, 0.00390625
          %v916 = vmul.f32 %v884, 0.00390625
          %v917 = vmul.f32 %v885, 0.00390625
          %v918 = vmul.f32 %v886, 0.00390625
          %v919 = vmul.f32 %v887, 0.00390625
          %v920 = vmul.f32 %v888, 0.00390625
          %v921 = vmul.f32 %v889, 0.00390625
          %922 = vst.msk [vmem:[%s308] sm:$0xff] %vm822, %v890
          %923 = vst.msk [vmem:[%s308 + $0x8] sm:$0xff] %vm822, %v891
          %924 = vst.msk [vmem:[%s308 + $0x10] sm:$0xff] %vm822, %v892
          %925 = vst.msk [vmem:[%s308 + $0x18] sm:$0xff] %vm822, %v893
          %926 = vst.msk [vmem:[%s308 + $0x20] sm:$0xff] %vm822, %v894
          %927 = vst.msk [vmem:[%s308 + $0x28] sm:$0xff] %vm822, %v895
          %928 = vst.msk [vmem:[%s308 + $0x30] sm:$0xff] %vm822, %v896
          %929 = vst.msk [vmem:[%s308 + $0x38] sm:$0xff] %vm822, %v897
          %930 = vst.msk [vmem:[%s308 + $0x40] sm:$0xff] %vm822, %v898
          %931 = vst.msk [vmem:[%s308 + $0x48] sm:$0xff] %vm822, %v899
          %932 = vst.msk [vmem:[%s308 + $0x50] sm:$0xff] %vm822, %v900
          %933 = vst.msk [vmem:[%s308 + $0x58] sm:$0xff] %vm822, %v901
          %934 = vst.msk [vmem:[%s308 + $0x60] sm:$0xff] %vm822, %v902
          %935 = vst.msk [vmem:[%s308 + $0x68] sm:$0xff] %vm822, %v903
          %936 = vst.msk [vmem:[%s308 + $0x70] sm:$0xff] %vm822, %v904
          %937 = vst.msk [vmem:[%s308 + $0x78] sm:$0xff] %vm822, %v905
          %938 = vst.msk [vmem:[%s308 + $0x80] sm:$0xff] %vm822, %v906
          %939 = vst.msk [vmem:[%s308 + $0x88] sm:$0xff] %vm822, %v907
          %940 = vst.msk [vmem:[%s308 + $0x90] sm:$0xff] %vm822, %v908
          %941 = vst.msk [vmem:[%s308 + $0x98] sm:$0xff] %vm822, %v909
          %942 = vst.msk [vmem:[%s308 + $0xa0] sm:$0xff] %vm822, %v910
          %943 = vst.msk [vmem:[%s308 + $0xa8] sm:$0xff] %vm822, %v911
          %944 = vst.msk [vmem:[%s308 + $0xb0] sm:$0xff] %vm822, %v912
          %945 = vst.msk [vmem:[%s308 + $0xb8] sm:$0xff] %vm822, %v913
          %946 = vst.msk [vmem:[%s308 + $0xc0] sm:$0xff] %vm822, %v914
          %947 = vst.msk [vmem:[%s308 + $0xc8] sm:$0xff] %vm822, %v915
          %948 = vst.msk [vmem:[%s308 + $0xd0] sm:$0xff] %vm822, %v916
          %949 = vst.msk [vmem:[%s308 + $0xd8] sm:$0xff] %vm822, %v917
          %950 = vst.msk [vmem:[%s308 + $0xe0] sm:$0xff] %vm822, %v918
          %951 = vst.msk [vmem:[%s308 + $0xe8] sm:$0xff] %vm822, %v919
          %952 = vst.msk [vmem:[%s308 + $0xf0] sm:$0xff] %vm822, %v920
          %953 = vst.msk [vmem:[%s308 + $0xf8] sm:$0xff] %vm822, %v921
        $region48: #{tpu_custom_call.1} parent=31 // pred_fallthru
          _
        %s954 = sand.u32 %s127, 1
        %s955 = scalar_lea.sflag [#allocation4], %s954
        %s956 = sand.u32 %s127, 1
        %s957 = smul.addr %s956, 2
        %s958 = scalar_lea.vmem [#allocation7], %s957
        %p959 = scmp.lt.s32.totalorder %s29, 1
        %s960 = scalar_select %p959, %s29, 1
        %s961 = smul.addr %s960, 32
        %s962 = smul.addr %s961, 8
        %s963 = scalar_lea.vmem %s4, %s962
        // Predicated region
        $region49: #{tpu_custom_call.1} parent=31 // pred_check
          %p964 = pneg %p137
        $region50: #{tpu_custom_call.1} parent=31 // pred_check_branch
          %966 = sbr.rel (%p964) target = $region52
        $region51: #{tpu_custom_call.1} parent=31 // pred_region
          %s967 = smul.u32 2, %s30
          %s969 = ssub.s32 32, 32
          %970 = vsyncadd %s955, %s969
          %s971 = smul.addr %s29, 2
          %s972 = sadd.s32 %s967, %s971
          %s973 = smul.addr %s972, 16
          %s974 = scalar_lea.hbm %s3, %s973
          %s976 = sshll.u32 %s958, 4
          %s977 = int_to_ptr.vmem [resolvable:$true] %s976
          %979 = dma.vmem_to_hbm [thread:$0]  %s977, 32, %s974, %s955
        $region52: #{tpu_custom_call.1} parent=31 // pred_fallthru
          _
        // Predicated region
        $region53: #{tpu_custom_call.1} parent=31 // pred_check
          %p980 = pneg %p163
        $region54: #{tpu_custom_call.1} parent=31 // pred_check_branch
          %982 = sbr.rel (%p980) target = $region56
        $region55: #{tpu_custom_call.1} parent=31 // pred_region
          _
        $region56: #{tpu_custom_call.1} parent=31 // pred_fallthru
          _
      $region32: #{tpu_custom_call.1} parent=5 // pred_fallthru
        _
      %p983 = scmp.le.s32.totalorder 2, %s20
      // Predicated region
      $region57: #{tpu_custom_call.1} parent=5 // pred_check
        %p984 = pneg %p983
      $region58: #{tpu_custom_call.1} parent=5 // pred_check_branch
        %986 = sbr.rel (%p984) target = $region60
      $region59: #{tpu_custom_call.1} parent=5 // pred_region
        %s987 = ssub.s32 %s20, 2
        // Predicated region
        $region61: #{tpu_custom_call.1} parent=59 // pred_check
          %p988 = pneg %p143
        $region62: #{tpu_custom_call.1} parent=59 // pred_check_branch
          %990 = sbr.rel (%p988) target = $region64
        $region63: #{tpu_custom_call.1} parent=59 // pred_region
          %s991 = sand.u32 %s128, 1
          %s992 = scalar_lea.sflag [#allocation4], %s991
          %s993 = sand.u32 %s128, 1
          %s994 = smul.addr %s993, 2
          %s995 = scalar_lea.vmem [#allocation7], %s994
          %996 = dma.done %s992, 32
        $region64: #{tpu_custom_call.1} parent=59 // pred_fallthru
          _
        // Predicated region
        $region65: #{tpu_custom_call.1} parent=59 // pred_check
          %p997 = pneg %p169
        $region66: #{tpu_custom_call.1} parent=59 // pred_check_branch
          %999 = sbr.rel (%p997) target = $region68
        $region67: #{tpu_custom_call.1} parent=59 // pred_region
          %p1000 = scmp.lt.s32.totalorder %s31, 1
          %s1001 = scalar_select %p1000, %s31, 1
          %s1002 = smul.addr %s1001, 32
          %s1003 = smul.addr %s1002, 8
          %s1004 = scalar_lea.vmem %s4, %s1003
        $region68: #{tpu_custom_call.1} parent=59 // pred_fallthru
          _
      $region60: #{tpu_custom_call.1} parent=5 // pred_fallthru
        _
    $region6: #{tpu_custom_call.1} parent=1 // loop_footer
      %s24 = sadd.s32 1, %s20
    $region7: #{tpu_custom_call.1} parent=1 // loop_footer_branch
      %19 = sbr.rel target = $region3
    $region8: #{tpu_custom_call.1} parent=1 // loop_exit
      _
    %1005 = vsyncpa [#allocation3], 1
    %s1006 = scalar_lea.sflag [#allocation3], 1
    %1007 = vsyncpa %s1006, 1
    %1008 = vsyncpa [#allocation6], 1
    %s1009 = scalar_lea.sflag [#allocation6], 1
    %1010 = vsyncpa %s1009, 1
    %1011 = vsyncpa [#allocation4], 1
    %s1012 = scalar_lea.sflag [#allocation4], 1
    %1013 = vsyncpa %s1012, 1

</llo_original>
